<compile_context>
chip_gen: v7x
topology: tpu7x:2x2x1
jax: 0.10.0
libtpu: 0.0.40
codegen_flags: <defaults>
</compile_context>

<pallas_src>
import functools

import jax
import jax.numpy as jnp
from jax.experimental import pallas as pl
from jax.experimental.pallas import tpu as pltpu

HIDDEN = 64
LANE = 128


def _round_up(n, m):
    return ((n + m - 1) // m) * m


def _fused_mlp_kernel(x_ref, w_ref, w3_ref, b_ref, b3_ref, o_ref, *, obs_pad):
    """One batch tile of the fused actor-critic MLP.

    x_ref : (tm, obs_pad)            f32   observations (batch tile)
    w_ref : (obs_pad+128, 128)       bf16/f32  ragged weight slab:
              rows [0, obs_pad)          -> shared Linear(obs, 64)   (cols 0:64)
              rows [obs_pad, obs_pad+64) -> shared Linear(64, 64)    (cols 0:64)
              rows [obs_pad+64, ...+128) -> fused heads [wp1 | wv1]  (cols 0:128)
    w3_ref: (128, OUT_PAD)           bf16/f32  block-diag [[wp2, 0], [0, wv2]]
    b_ref : (3, 1, 128)              f32   biases for layers 0..2
    b3_ref: (1, OUT_PAD)             f32   [bp2 | bv2] bias
    o_ref : (tm, OUT_PAD)            f32   [logits | value | 0...]
    """
    cdt = w_ref.dtype  # compute dtype for the MXU operands (bf16 or f32)

    x = x_ref[...].astype(cdt)

    # Layer 0: shared Linear(obs, 64) + ReLU  (K = obs_pad, lanes 64:128 stay zero).
    h = jnp.dot(x, w_ref[0:obs_pad, :], preferred_element_type=jnp.float32)
    h = jnp.maximum(h + b_ref[0], 0.0)

    # Layer 1: shared Linear(64, 64) + ReLU  (contract only the 64 live lanes).
    h = jnp.dot(h[:, :HIDDEN].astype(cdt), w_ref[obs_pad:obs_pad + HIDDEN, :],
                preferred_element_type=jnp.float32)
    h = jnp.maximum(h + b_ref[1], 0.0)

    # Layer 2: fused heads [wp1 | wv1] -> lanes [0:64]=policy hidden, [64:128]=value hidden.
    h = jnp.dot(h[:, :HIDDEN].astype(cdt),
                w_ref[obs_pad + HIDDEN:obs_pad + 2 * HIDDEN, :],
                preferred_element_type=jnp.float32)
    h = jnp.maximum(h + b_ref[2], 0.0)

    # Layer 3: block-diagonal [[wp2, 0], [0, wv2]] -> narrow [logits | value] slab.
    y = jnp.dot(h.astype(cdt), w3_ref[...], preferred_element_type=jnp.float32)
    o_ref[...] = y + b3_ref[...]


def pack_params(p, obs_dim, action_size, param_dtype=jnp.bfloat16):
    """Pack the 12 Linear tensors into a ragged weight slab + narrow output weights.

    Returns a dict with:
      W  : (obs_pad + 128, 128) param_dtype   (layers 0..2, ragged row blocks)
      W3 : (128, OUT_PAD)       param_dtype   (block-diagonal output layer)
      b  : (3, 1, 128)          f32
      b3 : (1, OUT_PAD)         f32
    """
    obs_pad = max(8, _round_up(obs_dim, 8))
    out_pad = max(8, _round_up(action_size + 1, 8))

    R = obs_pad + 2 * HIDDEN
    W = jnp.zeros((R, LANE), jnp.float32)
    W = W.at[:obs_dim, :HIDDEN].set(p["w1"])                                   # layer 0
    W = W.at[obs_pad:obs_pad + HIDDEN, :HIDDEN].set(p["w2"])                   # layer 1
    W = W.at[obs_pad + HIDDEN:obs_pad + 2 * HIDDEN, :HIDDEN].set(p["wp1"])     # heads:
    W = W.at[obs_pad + HIDDEN:obs_pad + 2 * HIDDEN, HIDDEN:2 * HIDDEN].set(p["wv1"])

    W3 = jnp.zeros((LANE, out_pad), jnp.float32)
    W3 = W3.at[:HIDDEN, :action_size].set(p["wp2"])                            # logits
    W3 = W3.at[HIDDEN:2 * HIDDEN, action_size].set(p["wv2"].reshape(-1))       # value

    b = jnp.zeros((3, 1, LANE), jnp.float32)
    b = b.at[0, 0, :HIDDEN].set(p["b1"].reshape(-1))
    b = b.at[1, 0, :HIDDEN].set(p["b2"].reshape(-1))
    b = b.at[2, 0, :HIDDEN].set(p["bp1"].reshape(-1))
    b = b.at[2, 0, HIDDEN:2 * HIDDEN].set(p["bv1"].reshape(-1))

    b3 = jnp.zeros((1, out_pad), jnp.float32)
    b3 = b3.at[0, :action_size].set(p["bp2"].reshape(-1))
    b3 = b3.at[0, action_size].set(p["bv2"].reshape(-1)[0])

    return {
        "W": W.astype(param_dtype),
        "W3": W3.astype(param_dtype),
        "b": b,
        "b3": b3,
        "obs_dim": obs_dim,
        "obs_pad": obs_pad,
        "out_pad": out_pad,
        "action_size": action_size,
    }


def actor_critic_forward(obs, packed, *, tile_m=2048):
    """obs: (B, obs_dim) f32. Returns (logits (B, action_size), value (B, 1)).

    tile_m is a sweep parameter; at tile_m <= 4096 the default scoped-VMEM limit is
    sufficient on all generations (raise vmem_limit_bytes for larger tiles).
    Note: for B <~ 256 the per-call weight DMA + launch overhead dominates — batch
    multiple env steps per call (or use plain XLA) for the per-step inference path.
    """
    B, obs_dim = obs.shape
    assert obs_dim == packed["obs_dim"]
    obs_pad = packed["obs_pad"]
    out_pad = packed["out_pad"]
    action_size = packed["action_size"]
    W, W3, b, b3 = packed["W"], packed["W3"], packed["b"], packed["b3"]
    R = W.shape[0]

    # Batch tiling: single full-extent tile for small B; otherwise an even number of
    # tiles (balanced across v7x's two TensorCores under the "parallel" semantics).
    if B <= tile_m:
        n_tiles = 1
        tm = max(8, _round_up(B, 8))
    else:
        n_tiles = pl.cdiv(B, tile_m)
        if n_tiles % 2:
            n_tiles += 1
        tm = max(8, _round_up(pl.cdiv(B, n_tiles), 8))
    b_pad = n_tiles * tm

    # Batch-pad (and sublane-pad obs_dim to a multiple of 8) only if actually needed;
    # no 128-lane padding of the observation features.
    if b_pad != B or obs_pad != obs_dim:
        x = jnp.zeros((b_pad, obs_pad), obs.dtype).at[:B, :obs_dim].set(obs)
    else:
        x = obs

    kernel = functools.partial(_fused_mlp_kernel, obs_pad=obs_pad)

    out = pl.pallas_call(
        kernel,
        out_shape=jax.ShapeDtypeStruct((b_pad, out_pad), jnp.float32),
        grid=(n_tiles,),
        in_specs=[
            pl.BlockSpec((tm, obs_pad), lambda i: (i, 0)),
            # Constant index_maps -> weight/bias blocks stay VMEM-resident across steps.
            pl.BlockSpec((R, LANE), lambda i: (0, 0)),
            pl.BlockSpec((LANE, out_pad), lambda i: (0, 0)),
            pl.BlockSpec((3, 1, LANE), lambda i: (0, 0, 0)),
            pl.BlockSpec((1, out_pad), lambda i: (0, 0)),
        ],
        out_specs=pl.BlockSpec((tm, out_pad), lambda i: (i, 0)),
        compiler_params=pltpu.CompilerParams(
            dimension_semantics=("parallel",)),
    )(x, W, W3, b, b3)

    logits = out[:B, :action_size]
    value = out[:B, action_size:action_size + 1]
    return logits, value


def init_params(key, obs_dim, action_size, hidden=HIDDEN):
    """Deterministic synthetic init mirroring the nn.Linear shapes of the module."""
    def linear(key, fan_in, fan_out):
        kw, kb = jax.random.split(key)
        bound = 1.0 / jnp.sqrt(fan_in)  # PyTorch default U(-1/sqrt(fan_in), 1/sqrt(fan_in))
        w = jax.random.uniform(kw, (fan_in, fan_out), jnp.float32, -bound, bound)
        b = jax.random.uniform(kb, (1, fan_out), jnp.float32, -bound, bound)
        return w, b

    keys = jax.random.split(key, 6)
    p = {}
    p["w1"], p["b1"] = linear(keys[0], obs_dim, hidden)        # shared Linear(obs,64)
    p["w2"], p["b2"] = linear(keys[1], hidden, hidden)         # shared Linear(64,64)
    p["wp1"], p["bp1"] = linear(keys[2], hidden, hidden)       # policy Linear(64,64)
    p["wp2"], p["bp2"] = linear(keys[3], hidden, action_size)  # policy Linear(64,act)
    p["wv1"], p["bv1"] = linear(keys[4], hidden, hidden)       # value Linear(64,64)
    p["wv2"], p["bv2"] = linear(keys[5], hidden, 1)            # value Linear(64,1)
    return p


def reference_forward(obs, p):
    """Pure-JAX reference replicating the PyTorch forward exactly (f32)."""
    z = jnp.maximum(obs @ p["w1"] + p["b1"], 0.0)
    z = jnp.maximum(z @ p["w2"] + p["b2"], 0.0)
    ph = jnp.maximum(z @ p["wp1"] + p["bp1"], 0.0)
    logits = ph @ p["wp2"] + p["bp2"]
    vh = jnp.maximum(z @ p["wv1"] + p["bv1"], 0.0)
    value = vh @ p["wv2"] + p["bv2"]
    return logits, value


if __name__ == "__main__":
    key = jax.random.PRNGKey(0)
    k_obs, k_obs2, k_params = jax.random.split(key, 3)

    obs_dim = 16        # obs_space_size
    action_size = 4     # action_space_size
    params = init_params(k_params, obs_dim, action_size)

    # ---- Exactness check: f32 weight packing, tiny batch, single-tile grid ----
    packed_f32 = pack_params(params, obs_dim, action_size, param_dtype=jnp.float32)
    batch = 8
    obs = jax.random.normal(k_obs, (batch, obs_dim), dtype=jnp.float32)
    logits, value = actor_critic_forward(obs, packed_f32)
    logits, value = jax.block_until_ready((logits, value))

    ref_logits, ref_value = reference_forward(obs, params)
    assert logits.shape == (batch, action_size)
    assert value.shape == (batch, 1)
    assert jnp.allclose(logits, ref_logits, atol=1e-4, rtol=1e-4)
    assert jnp.allclose(value, ref_value, atol=1e-4, rtol=1e-4)

    # ---- Perf path: bf16 weights, rollout-style batch, multi-tile "parallel" grid ----
    # tile_m=128 here just to exercise the multi-tile / even-grid / batch-padding path
    # at small shapes (272 -> 4 tiles of 72 rows, b_pad=288).
    packed_bf16 = pack_params(params, obs_dim, action_size)   # default bf16 weights
    batch2 = 272
    obs2 = jax.random.normal(k_obs2, (batch2, obs_dim), dtype=jnp.float32)
    logits2, value2 = actor_critic_forward(obs2, packed_bf16, tile_m=128)
    logits2, value2 = jax.block_until_ready((logits2, value2))

    ref_logits2, ref_value2 = reference_forward(obs2, params)
    assert logits2.shape == (batch2, action_size)
    assert value2.shape == (batch2, 1)
    # bf16 weights / activations with f32 accumulation: loose tolerance vs f32 reference.
    assert jnp.allclose(logits2, ref_logits2, atol=1e-1, rtol=1e-1)
    assert jnp.allclose(value2, ref_value2, atol=1e-1, rtol=1e-1)

    print("KERNEL_OK")
</pallas_src>

<mosaic_0001>
module attributes {stable_mosaic.version = 11 : i64} {
  func.func @_fused_mlp_kernel(%arg0: i32, %arg1: memref<8x16xf32, #tpu.memory_space<vmem>>, %arg2: memref<144x128xf32, #tpu.memory_space<vmem>>, %arg3: memref<128x8xf32, #tpu.memory_space<vmem>>, %arg4: memref<3x1x128xf32, #tpu.memory_space<vmem>>, %arg5: memref<1x8xf32, #tpu.memory_space<vmem>>, %arg6: memref<8x8xf32, #tpu.memory_space<vmem>>) attributes {dimension_semantics = [#tpu.dimension_semantics<parallel>], iteration_bounds = array<i64: 1>, scalar_prefetch = 0 : i64, scratch_operands = 0 : i64, tpu.core_type = #tpu.core_type<tc>, window_params = [{transform_indices = @transform_0, window_bounds = array<i64: 8, 16>}, {pipeline_mode = #tpu.pipeline_mode<synchronous>, transform_indices = @transform_1, window_bounds = array<i64: 144, 128>}, {pipeline_mode = #tpu.pipeline_mode<synchronous>, transform_indices = @transform_2, window_bounds = array<i64: 128, 8>}, {pipeline_mode = #tpu.pipeline_mode<synchronous>, transform_indices = @transform_3, window_bounds = array<i64: 3, 1, 128>}, {pipeline_mode = #tpu.pipeline_mode<synchronous>, transform_indices = @transform_4, window_bounds = array<i64: 1, 8>}, {transform_indices = @transform_5, window_bounds = array<i64: 8, 8>}]} {
    %c0 = arith.constant 0 : index
    %c0_0 = arith.constant 0 : index
    %0 = vector.load %arg1[%c0, %c0_0] : memref<8x16xf32, #tpu.memory_space<vmem>>, vector<8x16xf32>
    %c0_1 = arith.constant 0 : index
    %c0_2 = arith.constant 0 : index
    %1 = vector.load %arg2[%c0_1, %c0_2] : memref<144x128xf32, #tpu.memory_space<vmem>>, vector<16x128xf32>
    %cst = arith.constant dense<0.000000e+00> : vector<8x128xf32>
    %2 = tpu.matmul %0, %1, %cst {dimension_numbers = #tpu.dot_dimension_numbers<[1], [0], [0], [1], [0, 0, 1, 1], [], []>} : vector<8x16xf32>, vector<16x128xf32>, vector<8x128xf32> -> vector<8x128xf32>
    %c0_3 = arith.constant 0 : index
    %c0_4 = arith.constant 0 : index
    %c0_5 = arith.constant 0 : index
    %3 = vector.load %arg4[%c0_3, %c0_4, %c0_5] : memref<3x1x128xf32, #tpu.memory_space<vmem>>, vector<1x1x128xf32>
    %4 = vector.shape_cast %3 : vector<1x1x128xf32> to vector<1x128xf32>
    %5 = vector.broadcast %4 : vector<1x128xf32> to vector<8x128xf32>
    %6 = arith.addf %2, %5 : vector<8x128xf32>
    %cst_6 = arith.constant 0.000000e+00 : f32
    %7 = vector.broadcast %cst_6 : f32 to vector<8x128xf32>
    %8 = arith.maximumf %6, %7 : vector<8x128xf32>
    %9 = vector.extract_strided_slice %8 {offsets = [0, 0], sizes = [8, 64], strides = [1, 1]} : vector<8x128xf32> to vector<8x64xf32>
    %c16 = arith.constant 16 : index
    %c0_7 = arith.constant 0 : index
    %10 = vector.load %arg2[%c16, %c0_7] : memref<144x128xf32, #tpu.memory_space<vmem>>, vector<64x128xf32>
    %cst_8 = arith.constant dense<0.000000e+00> : vector<8x128xf32>
    %11 = tpu.matmul %9, %10, %cst_8 {dimension_numbers = #tpu.dot_dimension_numbers<[1], [0], [0], [1], [0, 0, 1, 1], [], []>} : vector<8x64xf32>, vector<64x128xf32>, vector<8x128xf32> -> vector<8x128xf32>
    %c1 = arith.constant 1 : index
    %c0_9 = arith.constant 0 : index
    %c0_10 = arith.constant 0 : index
    %12 = vector.load %arg4[%c1, %c0_9, %c0_10] : memref<3x1x128xf32, #tpu.memory_space<vmem>>, vector<1x1x128xf32>
    %13 = vector.shape_cast %12 : vector<1x1x128xf32> to vector<1x128xf32>
    %14 = vector.broadcast %13 : vector<1x128xf32> to vector<8x128xf32>
    %15 = arith.addf %11, %14 : vector<8x128xf32>
    %cst_11 = arith.constant 0.000000e+00 : f32
    %16 = vector.broadcast %cst_11 : f32 to vector<8x128xf32>
    %17 = arith.maximumf %15, %16 : vector<8x128xf32>
    %18 = vector.extract_strided_slice %17 {offsets = [0, 0], sizes = [8, 64], strides = [1, 1]} : vector<8x128xf32> to vector<8x64xf32>
    %c80 = arith.constant 80 : index
    %c0_12 = arith.constant 0 : index
    %19 = vector.load %arg2[%c80, %c0_12] : memref<144x128xf32, #tpu.memory_space<vmem>>, vector<64x128xf32>
    %cst_13 = arith.constant dense<0.000000e+00> : vector<8x128xf32>
    %20 = tpu.matmul %18, %19, %cst_13 {dimension_numbers = #tpu.dot_dimension_numbers<[1], [0], [0], [1], [0, 0, 1, 1], [], []>} : vector<8x64xf32>, vector<64x128xf32>, vector<8x128xf32> -> vector<8x128xf32>
    %c2 = arith.constant 2 : index
    %c0_14 = arith.constant 0 : index
    %c0_15 = arith.constant 0 : index
    %21 = vector.load %arg4[%c2, %c0_14, %c0_15] : memref<3x1x128xf32, #tpu.memory_space<vmem>>, vector<1x1x128xf32>
    %22 = vector.shape_cast %21 : vector<1x1x128xf32> to vector<1x128xf32>
    %23 = vector.broadcast %22 : vector<1x128xf32> to vector<8x128xf32>
    %24 = arith.addf %20, %23 : vector<8x128xf32>
    %cst_16 = arith.constant 0.000000e+00 : f32
    %25 = vector.broadcast %cst_16 : f32 to vector<8x128xf32>
    %26 = arith.maximumf %24, %25 : vector<8x128xf32>
    %c0_17 = arith.constant 0 : index
    %c0_18 = arith.constant 0 : index
    %27 = vector.load %arg3[%c0_17, %c0_18] : memref<128x8xf32, #tpu.memory_space<vmem>>, vector<128x8xf32>
    %cst_19 = arith.constant dense<0.000000e+00> : vector<8x8xf32>
    %28 = tpu.matmul %26, %27, %cst_19 {dimension_numbers = #tpu.dot_dimension_numbers<[1], [0], [0], [1], [0, 0, 1, 1], [], []>} : vector<8x128xf32>, vector<128x8xf32>, vector<8x8xf32> -> vector<8x8xf32>
    %c0_20 = arith.constant 0 : index
    %c0_21 = arith.constant 0 : index
    %29 = vector.load %arg5[%c0_20, %c0_21] : memref<1x8xf32, #tpu.memory_space<vmem>>, vector<1x8xf32>
    %30 = vector.broadcast %29 : vector<1x8xf32> to vector<8x8xf32>
    %31 = arith.addf %28, %30 : vector<8x8xf32>
    %c0_22 = arith.constant 0 : index
    %c0_23 = arith.constant 0 : index
    %32 = vector.load %arg6[%c0_22, %c0_23] : memref<8x8xf32, #tpu.memory_space<vmem>>, vector<8x8xf32>
    tpu.vector_store %arg6[%c0_22, %c0_23], %31 {strides = array<i32>} : memref<8x8xf32, #tpu.memory_space<vmem>>, vector<8x8xf32>,
    return
  }
  func.func @transform_0(%arg0: i32) -> (i32, i32) {
    %c0_i32 = arith.constant 0 : i32
    %c0_i32_0 = arith.constant 0 : i32
    return %arg0, %c0_i32 : i32, i32
  }
  func.func @transform_1(%arg0: i32) -> (i32, i32) {
    %c0_i32 = arith.constant 0 : i32
    %c0_i32_0 = arith.constant 0 : i32
    %c0_i32_1 = arith.constant 0 : i32
    return %c0_i32, %c0_i32_0 : i32, i32
  }
  func.func @transform_2(%arg0: i32) -> (i32, i32) {
    %c0_i32 = arith.constant 0 : i32
    %c0_i32_0 = arith.constant 0 : i32
    %c0_i32_1 = arith.constant 0 : i32
    return %c0_i32, %c0_i32_0 : i32, i32
  }
  func.func @transform_3(%arg0: i32) -> (i32, i32, i32) {
    %c0_i32 = arith.constant 0 : i32
    %c0_i32_0 = arith.constant 0 : i32
    %c0_i32_1 = arith.constant 0 : i32
    %c0_i32_2 = arith.constant 0 : i32
    return %c0_i32, %c0_i32_0, %c0_i32_1 : i32, i32, i32
  }
  func.func @transform_4(%arg0: i32) -> (i32, i32) {
    %c0_i32 = arith.constant 0 : i32
    %c0_i32_0 = arith.constant 0 : i32
    %c0_i32_1 = arith.constant 0 : i32
    return %c0_i32, %c0_i32_0 : i32, i32
  }
  func.func @transform_5(%arg0: i32) -> (i32, i32) {
    %c0_i32 = arith.constant 0 : i32
    %c0_i32_0 = arith.constant 0 : i32
    return %arg0, %c0_i32 : i32, i32
  }
}

</mosaic_0001>

<llo_original>
// kernel: tpu_custom_call.1
$region0: #{tpu_custom_call.1}
  #allocation0 [shape = 'u32[]', space=smem, size = 0x4, offset = 0x4, fixed_abs, tag = 'smem constant byte address 0x4 - core index']
  #allocation1 [shape = 'u32[144,128]{1,0:T(1,128)}', space=vmem, size = 0x12000, scoped, tag = 'internal scratch']
  %s0 = inlined_call_operand.vmem [shape: f32[8,16], index: 0, kind: input, shape index: {}]
  %s1 = inlined_call_operand.hbm [shape: f32[144,128], index: 1, kind: input, shape index: {}]
  %s2 = inlined_call_operand.vmem [shape: f32[128,8], index: 2, kind: input, shape index: {}]
  %s3 = inlined_call_operand.vmem [shape: f32[3,1,128], index: 3, kind: input, shape index: {}]
  %s4 = inlined_call_operand.vmem [shape: f32[1,8], index: 4, kind: input, shape index: {}]
  %s5 = inlined_call_operand.hbm [shape: f32[8,8], index: 5, kind: output, shape index: {}]
  %s6 = sld [smem:[#allocation0]]
  $region34: #{tpu_custom_call.1} parent=0
    _
  %s8 = ssub.s32 1, %s6
  %s9 = scalar_select 0, %s8, %s6
  $region1: #{tpu_custom_call.1} parent=0
    #allocation2 [shape = 'u8[73728]{0}', space=vmem, size = 0x12000, scoped, tag = 'input window, operand 1, single buffered']
    #allocation3 [shape = 's32[1]{0}', space=sflag, size = 0x4, scoped, tag = 'scoped memory for tpu_custom_call.1']
    #allocation4 [shape = 's32[1]{0}', space=sflag, size = 0x4, scoped, tag = 'scoped memory for tpu_custom_call.1']
    #allocation5 [shape = 'u8[4096]{0}', space=vmem, size = 0x1000, scoped, tag = 'output window, operand 0, single buffered']
    %10 = vsyncpa [#allocation3], 0
    %11 = vsyncpa [#allocation4], 0
    // Predicated region
    $region2: #{tpu_custom_call.1} parent=1 // pred_check
      _
    $region3: #{tpu_custom_call.1} parent=1 // pred_check_branch
      %13 = sbr.rel (0) target = $region5
    $region4: #{tpu_custom_call.1} parent=1 // pred_region
      _
    $region5: #{tpu_custom_call.1} parent=1 // pred_fallthru
      _
    // Predicated region
    $region6: #{tpu_custom_call.1} parent=1 // pred_check
      _
    $region7: #{tpu_custom_call.1} parent=1 // pred_check_branch
      %15 = sbr.rel (0) target = $region9
    $region8: #{tpu_custom_call.1} parent=1 // pred_region
      %s17 = ssub.s32 2304, 2304
      %18 = vsyncadd [#allocation3], %s17
      %s19 = sshll.u32 [#allocation2], 4
      %s20 = int_to_ptr.vmem [resolvable:$true] %s19
      %25 = dma.hbm_to_vmem [thread:$0]  %s1, 2304, %s20, [#allocation3], 128, 128, 8
    $region9: #{tpu_custom_call.1} parent=1 // pred_fallthru
      _
    // Predicated region
    $region10: #{tpu_custom_call.1} parent=1 // pred_check
      _
    $region11: #{tpu_custom_call.1} parent=1 // pred_check_branch
      %27 = sbr.rel (0) target = $region13
    $region12: #{tpu_custom_call.1} parent=1 // pred_region
      _
    $region13: #{tpu_custom_call.1} parent=1 // pred_fallthru
      _
    // Predicated region
    $region14: #{tpu_custom_call.1} parent=1 // pred_check
      _
    $region15: #{tpu_custom_call.1} parent=1 // pred_check_branch
      %29 = sbr.rel (0) target = $region17
    $region16: #{tpu_custom_call.1} parent=1 // pred_region
      _
    $region17: #{tpu_custom_call.1} parent=1 // pred_fallthru
      _
    // Predicated region
    $region18: #{tpu_custom_call.1} parent=1 // pred_check
      _
    $region19: #{tpu_custom_call.1} parent=1 // pred_check_branch
      %31 = sbr.rel (0) target = $region21
    $region20: #{tpu_custom_call.1} parent=1 // pred_region
      _
    $region21: #{tpu_custom_call.1} parent=1 // pred_fallthru
      _
    // Predicated region
    $region22: #{tpu_custom_call.1} parent=1 // pred_check
      _
    $region23: #{tpu_custom_call.1} parent=1 // pred_check_branch
      %33 = sbr.rel (0) target = $region25
    $region24: #{tpu_custom_call.1} parent=1 // pred_region
      %34 = dma.done [#allocation3], 2304
    $region25: #{tpu_custom_call.1} parent=1 // pred_fallthru
      _
    %v35 = vld [vmem:[%s0] sm:$0xff]
    %v36 = vld [vmem:[#allocation2] sm:$0xff]
    %v37 = vld [vmem:[#allocation2 + $0x8] sm:$0xff]
    %v38 = vld [vmem:[%s3] sm:$0x1]
    %v40 = vlaneseq
    %v41 = vshrl.u32 %v40, 7
    %v42 = vsub.s32 0, %v41
    %v43 = vrot.slane %v38, %v42
    %vm45 = vcmask 130048
    %v47 = vsel %vm45, %v35, 0
    %49 = vmatprep.subr.mxu0 0.0
    %50 = vmatpush1.msra.mxu0 %v36
    %51 = vmatprep.subr.mxu0 0.0
    %52 = vmatpush1.msra.mxu0 %v37
    %53 = vmatprep.subr.mxu0 0.0
    %54 = vmatpush1.msra.mxu0 0.0
    %55 = vmatprep.subr.mxu0 0.0
    %56 = vmatpush1.msra.mxu0 0.0
    %57 = vmatprep.subr.mxu0 0.0
    %58 = vmatpush1.msra.mxu0 0.0
    %59 = vmatprep.subr.mxu0 0.0
    %60 = vmatpush1.msra.mxu0 0.0
    %61 = vmatprep.subr.mxu0 0.0
    %62 = vmatpush1.msra.mxu0 0.0
    %63 = vmatprep.subr.mxu0 0.0
    %64 = vmatpush1.msra.mxu0 0.0
    %65 = vmatprep.subr.mxu0 0.0
    %66 = vmatpush1.msra.mxu0 0.0
    %67 = vmatprep.subr.mxu0 0.0
    %68 = vmatpush1.msra.mxu0 0.0
    %69 = vmatprep.subr.mxu0 0.0
    %70 = vmatpush1.msra.mxu0 0.0
    %71 = vmatprep.subr.mxu0 0.0
    %72 = vmatpush1.msra.mxu0 0.0
    %73 = vmatprep.subr.mxu0 0.0
    %74 = vmatpush1.msra.mxu0 0.0
    %75 = vmatprep.subr.mxu0 0.0
    %76 = vmatpush1.msra.mxu0 0.0
    %77 = vmatprep.subr.mxu0 0.0
    %78 = vmatpush1.msra.mxu0 0.0
    %79 = vmatprep.subr.mxu0 0.0
    %80 = vmatpush1.msra.mxu0 0.0
    %81 = vmatprep.subr.mxu0 0.0
    %82 = vmatpush1.msra.mxu0 0.0
    %83 = vmatprep.subr.mxu0 0.0
    %84 = vmatpush1.msra.mxu0 0.0
    %85 = vmatprep.subr.mxu0 0.0
    %86 = vmatpush1.msra.mxu0 0.0
    %87 = vmatprep.subr.mxu0 0.0
    %88 = vmatpush1.msra.mxu0 0.0
    %89 = vmatprep.subr.mxu0 0.0
    %90 = vmatpush1.msra.mxu0 0.0
    %91 = vmatprep.subr.mxu0 0.0
    %92 = vmatpush1.msra.mxu0 0.0
    %93 = vmatprep.subr.mxu0 0.0
    %94 = vmatpush1.msra.mxu0 0.0
    %95 = vmatprep.subr.mxu0 0.0
    %96 = vmatpush1.msra.mxu0 0.0
    %97 = vmatprep.subr.mxu0 0.0
    %98 = vmatpush1.msra.mxu0 0.0
    %99 = vmatprep.subr.mxu0 0.0
    %100 = vmatpush1.msra.mxu0 0.0
    %101 = vmatprep.subr.mxu0 0.0
    %102 = vmatpush1.msra.mxu0 0.0
    %103 = vmatprep.subr.mxu0 0.0
    %104 = vmatpush1.msra.mxu0 0.0
    %105 = vmatprep.subr.mxu0 0.0
    %106 = vmatpush1.msra.mxu0 0.0
    %107 = vmatprep.subr.mxu0 0.0
    %108 = vmatpush1.msra.mxu0 0.0
    %109 = vmatprep.subr.mxu0 0.0
    %110 = vmatpush1.msra.mxu0 0.0
    %111 = vmatprep.subr.mxu0 0.0
    %112 = vmatpush1.msra.mxu0 0.0
    %113 = vmatprep.mubr.f32.mxu0 0.0
    %114 = vmatmul.mubr.f32.gmra.mrb[0].mxu0 %v47
    %v115 = vpop.f32.mrb[0].mxu0
    %v116 = vadd.f32 %v43, %v115
    %v117 = vpop.f32.mrb[0].mxu0
    %118 = vdwg.mxu0
    %v119 = vmax.f32 %v116, 0.0
    %v120 = vld [vmem:[#allocation2 + $0x10] sm:$0xff]
    %v121 = vld [vmem:[#allocation2 + $0x18] sm:$0xff]
    %v122 = vld [vmem:[#allocation2 + $0x20] sm:$0xff]
    %v123 = vld [vmem:[#allocation2 + $0x28] sm:$0xff]
    %v124 = vld [vmem:[#allocation2 + $0x30] sm:$0xff]
    %v125 = vld [vmem:[#allocation2 + $0x38] sm:$0xff]
    %v126 = vld [vmem:[#allocation2 + $0x40] sm:$0xff]
    %v127 = vld [vmem:[#allocation2 + $0x48] sm:$0xff]
    %s128 = scalar_lea.vmem %s3, 1
    %v129 = vld [vmem:[%s128] sm:$0x1]
    %v131 = vlaneseq
    %v132 = vshrl.u32 %v131, 7
    %v133 = vsub.s32 0, %v132
    %v134 = vrot.slane %v129, %v133
    %vm136 = vcmask 523264
    %v138 = vsel %vm136, %v119, 0
    %140 = vmatprep.subr.mxu0 0.0
    %141 = vmatpush1.msra.mxu0 %v120
    %142 = vmatprep.subr.mxu0 0.0
    %143 = vmatpush1.msra.mxu0 %v121
    %144 = vmatprep.subr.mxu0 0.0
    %145 = vmatpush1.msra.mxu0 %v122
    %146 = vmatprep.subr.mxu0 0.0
    %147 = vmatpush1.msra.mxu0 %v123
    %148 = vmatprep.subr.mxu0 0.0
    %149 = vmatpush1.msra.mxu0 %v124
    %150 = vmatprep.subr.mxu0 0.0
    %151 = vmatpush1.msra.mxu0 %v125
    %152 = vmatprep.subr.mxu0 0.0
    %153 = vmatpush1.msra.mxu0 %v126
    %154 = vmatprep.subr.mxu0 0.0
    %155 = vmatpush1.msra.mxu0 %v127
    %156 = vmatprep.subr.mxu0 0.0
    %157 = vmatpush1.msra.mxu0 0.0
    %158 = vmatprep.subr.mxu0 0.0
    %159 = vmatpush1.msra.mxu0 0.0
    %160 = vmatprep.subr.mxu0 0.0
    %161 = vmatpush1.msra.mxu0 0.0
    %162 = vmatprep.subr.mxu0 0.0
    %163 = vmatpush1.msra.mxu0 0.0
    %164 = vmatprep.subr.mxu0 0.0
    %165 = vmatpush1.msra.mxu0 0.0
    %166 = vmatprep.subr.mxu0 0.0
    %167 = vmatpush1.msra.mxu0 0.0
    %168 = vmatprep.subr.mxu0 0.0
    %169 = vmatpush1.msra.mxu0 0.0
    %170 = vmatprep.subr.mxu0 0.0
    %171 = vmatpush1.msra.mxu0 0.0
    %172 = vmatprep.subr.mxu0 0.0
    %173 = vmatpush1.msra.mxu0 0.0
    %174 = vmatprep.subr.mxu0 0.0
    %175 = vmatpush1.msra.mxu0 0.0
    %176 = vmatprep.subr.mxu0 0.0
    %177 = vmatpush1.msra.mxu0 0.0
    %178 = vmatprep.subr.mxu0 0.0
    %179 = vmatpush1.msra.mxu0 0.0
    %180 = vmatprep.subr.mxu0 0.0
    %181 = vmatpush1.msra.mxu0 0.0
    %182 = vmatprep.subr.mxu0 0.0
    %183 = vmatpush1.msra.mxu0 0.0
    %184 = vmatprep.subr.mxu0 0.0
    %185 = vmatpush1.msra.mxu0 0.0
    %186 = vmatprep.subr.mxu0 0.0
    %187 = vmatpush1.msra.mxu0 0.0
    %188 = vmatprep.subr.mxu0 0.0
    %189 = vmatpush1.msra.mxu0 0.0
    %190 = vmatprep.subr.mxu0 0.0
    %191 = vmatpush1.msra.mxu0 0.0
    %192 = vmatprep.subr.mxu0 0.0
    %193 = vmatpush1.msra.mxu0 0.0
    %194 = vmatprep.subr.mxu0 0.0
    %195 = vmatpush1.msra.mxu0 0.0
    %196 = vmatprep.subr.mxu0 0.0
    %197 = vmatpush1.msra.mxu0 0.0
    %198 = vmatprep.subr.mxu0 0.0
    %199 = vmatpush1.msra.mxu0 0.0
    %200 = vmatprep.subr.mxu0 0.0
    %201 = vmatpush1.msra.mxu0 0.0
    %202 = vmatprep.subr.mxu0 0.0
    %203 = vmatpush1.msra.mxu0 0.0
    %204 = vmatprep.mubr.f32.mxu0 0.0
    %205 = vmatmul.mubr.f32.gmra.mrb[0].mxu0 %v138
    %v206 = vpop.f32.mrb[0].mxu0
    %v207 = vadd.f32 %v134, %v206
    %v208 = vpop.f32.mrb[0].mxu0
    %209 = vdwg.mxu0
    %v210 = vmax.f32 %v207, 0.0
    %v211 = vld [vmem:[#allocation2 + $0x50] sm:$0xff]
    %v212 = vld [vmem:[#allocation2 + $0x58] sm:$0xff]
    %v213 = vld [vmem:[#allocation2 + $0x60] sm:$0xff]
    %v214 = vld [vmem:[#allocation2 + $0x68] sm:$0xff]
    %v215 = vld [vmem:[#allocation2 + $0x70] sm:$0xff]
    %v216 = vld [vmem:[#allocation2 + $0x78] sm:$0xff]
    %v217 = vld [vmem:[#allocation2 + $0x80] sm:$0xff]
    %v218 = vld [vmem:[#allocation2 + $0x88] sm:$0xff]
    %s219 = scalar_lea.vmem %s3, 2
    %v220 = vld [vmem:[%s219] sm:$0x1]
    %v222 = vlaneseq
    %v223 = vshrl.u32 %v222, 7
    %v224 = vsub.s32 0, %v223
    %v225 = vrot.slane %v220, %v224
    %v228 = vsel %vm136, %v210, 0
    %230 = vmatprep.subr.mxu0 0.0
    %231 = vmatpush1.msra.mxu0 %v211
    %232 = vmatprep.subr.mxu0 0.0
    %233 = vmatpush1.msra.mxu0 %v212
    %234 = vmatprep.subr.mxu0 0.0
    %235 = vmatpush1.msra.mxu0 %v213
    %236 = vmatprep.subr.mxu0 0.0
    %237 = vmatpush1.msra.mxu0 %v214
    %238 = vmatprep.subr.mxu0 0.0
    %239 = vmatpush1.msra.mxu0 %v215
    %240 = vmatprep.subr.mxu0 0.0
    %241 = vmatpush1.msra.mxu0 %v216
    %242 = vmatprep.subr.mxu0 0.0
    %243 = vmatpush1.msra.mxu0 %v217
    %244 = vmatprep.subr.mxu0 0.0
    %245 = vmatpush1.msra.mxu0 %v218
    %246 = vmatprep.subr.mxu0 0.0
    %247 = vmatpush1.msra.mxu0 0.0
    %248 = vmatprep.subr.mxu0 0.0
    %249 = vmatpush1.msra.mxu0 0.0
    %250 = vmatprep.subr.mxu0 0.0
    %251 = vmatpush1.msra.mxu0 0.0
    %252 = vmatprep.subr.mxu0 0.0
    %253 = vmatpush1.msra.mxu0 0.0
    %254 = vmatprep.subr.mxu0 0.0
    %255 = vmatpush1.msra.mxu0 0.0
    %256 = vmatprep.subr.mxu0 0.0
    %257 = vmatpush1.msra.mxu0 0.0
    %258 = vmatprep.subr.mxu0 0.0
    %259 = vmatpush1.msra.mxu0 0.0
    %260 = vmatprep.subr.mxu0 0.0
    %261 = vmatpush1.msra.mxu0 0.0
    %262 = vmatprep.subr.mxu0 0.0
    %263 = vmatpush1.msra.mxu0 0.0
    %264 = vmatprep.subr.mxu0 0.0
    %265 = vmatpush1.msra.mxu0 0.0
    %266 = vmatprep.subr.mxu0 0.0
    %267 = vmatpush1.msra.mxu0 0.0
    %268 = vmatprep.subr.mxu0 0.0
    %269 = vmatpush1.msra.mxu0 0.0
    %270 = vmatprep.subr.mxu0 0.0
    %271 = vmatpush1.msra.mxu0 0.0
    %272 = vmatprep.subr.mxu0 0.0
    %273 = vmatpush1.msra.mxu0 0.0
    %274 = vmatprep.subr.mxu0 0.0
    %275 = vmatpush1.msra.mxu0 0.0
    %276 = vmatprep.subr.mxu0 0.0
    %277 = vmatpush1.msra.mxu0 0.0
    %278 = vmatprep.subr.mxu0 0.0
    %279 = vmatpush1.msra.mxu0 0.0
    %280 = vmatprep.subr.mxu0 0.0
    %281 = vmatpush1.msra.mxu0 0.0
    %282 = vmatprep.subr.mxu0 0.0
    %283 = vmatpush1.msra.mxu0 0.0
    %284 = vmatprep.subr.mxu0 0.0
    %285 = vmatpush1.msra.mxu0 0.0
    %286 = vmatprep.subr.mxu0 0.0
    %287 = vmatpush1.msra.mxu0 0.0
    %288 = vmatprep.subr.mxu0 0.0
    %289 = vmatpush1.msra.mxu0 0.0
    %290 = vmatprep.subr.mxu0 0.0
    %291 = vmatpush1.msra.mxu0 0.0
    %292 = vmatprep.subr.mxu0 0.0
    %293 = vmatpush1.msra.mxu0 0.0
    %294 = vmatprep.mubr.f32.mxu0 0.0
    %295 = vmatmul.mubr.f32.gmra.mrb[0].mxu0 %v228
    %v296 = vpop.f32.mrb[0].mxu0
    %v297 = vadd.f32 %v225, %v296
    %v298 = vpop.f32.mrb[0].mxu0
    %299 = vdwg.mxu0
    %v300 = vmax.f32 %v297, 0.0
    %v301 = vld [vmem:[%s2] sm:$0xff]
    %v302 = vld [vmem:[%s2 + $0x8] sm:$0xff]
    %v303 = vld [vmem:[%s2 + $0x10] sm:$0xff]
    %v304 = vld [vmem:[%s2 + $0x18] sm:$0xff]
    %v305 = vld [vmem:[%s2 + $0x20] sm:$0xff]
    %v306 = vld [vmem:[%s2 + $0x28] sm:$0xff]
    %v307 = vld [vmem:[%s2 + $0x30] sm:$0xff]
    %v308 = vld [vmem:[%s2 + $0x38] sm:$0xff]
    %v309 = vld [vmem:[%s2 + $0x40] sm:$0xff]
    %v310 = vld [vmem:[%s2 + $0x48] sm:$0xff]
    %v311 = vld [vmem:[%s2 + $0x50] sm:$0xff]
    %v312 = vld [vmem:[%s2 + $0x58] sm:$0xff]
    %v313 = vld [vmem:[%s2 + $0x60] sm:$0xff]
    %v314 = vld [vmem:[%s2 + $0x68] sm:$0xff]
    %v315 = vld [vmem:[%s2 + $0x70] sm:$0xff]
    %v316 = vld [vmem:[%s2 + $0x78] sm:$0xff]
    %v317 = vld [vmem:[%s4] sm:$0x1]
    %v319 = vlaneseq
    %v320 = vshrl.u32 %v319, 7
    %v321 = vsub.s32 0, %v320
    %v322 = vrot.slane %v317, %v321
    %324 = vmatprep.subr.mxu0 0.0
    %325 = vmatpush1.msra.mxu0 %v301
    %326 = vmatprep.subr.mxu0 0.0
    %327 = vmatpush1.msra.mxu0 %v302
    %328 = vmatprep.subr.mxu0 0.0
    %329 = vmatpush1.msra.mxu0 %v303
    %330 = vmatprep.subr.mxu0 0.0
    %331 = vmatpush1.msra.mxu0 %v304
    %332 = vmatprep.subr.mxu0 0.0
    %333 = vmatpush1.msra.mxu0 %v305
    %334 = vmatprep.subr.mxu0 0.0
    %335 = vmatpush1.msra.mxu0 %v306
    %336 = vmatprep.subr.mxu0 0.0
    %337 = vmatpush1.msra.mxu0 %v307
    %338 = vmatprep.subr.mxu0 0.0
    %339 = vmatpush1.msra.mxu0 %v308
    %340 = vmatprep.subr.mxu0 0.0
    %341 = vmatpush1.msra.mxu0 %v309
    %342 = vmatprep.subr.mxu0 0.0
    %343 = vmatpush1.msra.mxu0 %v310
    %344 = vmatprep.subr.mxu0 0.0
    %345 = vmatpush1.msra.mxu0 %v311
    %346 = vmatprep.subr.mxu0 0.0
    %347 = vmatpush1.msra.mxu0 %v312
    %348 = vmatprep.subr.mxu0 0.0
    %349 = vmatpush1.msra.mxu0 %v313
    %350 = vmatprep.subr.mxu0 0.0
    %351 = vmatpush1.msra.mxu0 %v314
    %352 = vmatprep.subr.mxu0 0.0
    %353 = vmatpush1.msra.mxu0 %v315
    %354 = vmatprep.subr.mxu0 0.0
    %355 = vmatpush1.msra.mxu0 %v316
    %356 = vmatprep.subr.mxu0 0.0
    %357 = vmatpush1.msra.mxu0 0.0
    %358 = vmatprep.subr.mxu0 0.0
    %359 = vmatpush1.msra.mxu0 0.0
    %360 = vmatprep.subr.mxu0 0.0
    %361 = vmatpush1.msra.mxu0 0.0
    %362 = vmatprep.subr.mxu0 0.0
    %363 = vmatpush1.msra.mxu0 0.0
    %364 = vmatprep.subr.mxu0 0.0
    %365 = vmatpush1.msra.mxu0 0.0
    %366 = vmatprep.subr.mxu0 0.0
    %367 = vmatpush1.msra.mxu0 0.0
    %368 = vmatprep.subr.mxu0 0.0
    %369 = vmatpush1.msra.mxu0 0.0
    %370 = vmatprep.subr.mxu0 0.0
    %371 = vmatpush1.msra.mxu0 0.0
    %372 = vmatprep.subr.mxu0 0.0
    %373 = vmatpush1.msra.mxu0 0.0
    %374 = vmatprep.subr.mxu0 0.0
    %375 = vmatpush1.msra.mxu0 0.0
    %376 = vmatprep.subr.mxu0 0.0
    %377 = vmatpush1.msra.mxu0 0.0
    %378 = vmatprep.subr.mxu0 0.0
    %379 = vmatpush1.msra.mxu0 0.0
    %380 = vmatprep.subr.mxu0 0.0
    %381 = vmatpush1.msra.mxu0 0.0
    %382 = vmatprep.subr.mxu0 0.0
    %383 = vmatpush1.msra.mxu0 0.0
    %384 = vmatprep.subr.mxu0 0.0
    %385 = vmatpush1.msra.mxu0 0.0
    %386 = vmatprep.subr.mxu0 0.0
    %387 = vmatpush1.msra.mxu0 0.0
    %388 = vmatprep.mubr.f32.mxu0 0.0
    %389 = vmatmul.mubr.f32.gmra.mrb[0].mxu0 %v300
    %v390 = vpop.f32.mrb[0].mxu0
    %v391 = vadd.f32 %v322, %v390
    %v392 = vpop.f32.mrb[0].mxu0
    %393 = vdwg.mxu0
    %vm394 = vcmask 64512
    %395 = vst.msk [vmem:[#allocation5] sm:$0xff] %vm394, %v391
    // Predicated region
    $region26: #{tpu_custom_call.1} parent=1 // pred_check
      _
    $region27: #{tpu_custom_call.1} parent=1 // pred_check_branch
      %397 = sbr.rel (0) target = $region29
    $region28: #{tpu_custom_call.1} parent=1 // pred_region
      %s399 = ssub.s32 128, 128
      %400 = vsyncadd [#allocation4], %s399
      %s402 = sshll.u32 [#allocation5], 4
      %s403 = int_to_ptr.vmem [resolvable:$true] %s402
      %405 = dma.vmem_to_hbm [thread:$0]  %s403, 128, %s5, [#allocation4]
    $region29: #{tpu_custom_call.1} parent=1 // pred_fallthru
      _
    // Predicated region
    $region30: #{tpu_custom_call.1} parent=1 // pred_check
      _
    $region31: #{tpu_custom_call.1} parent=1 // pred_check_branch
      %407 = sbr.rel (0) target = $region33
    $region32: #{tpu_custom_call.1} parent=1 // pred_region
      %408 = dma.done [#allocation4], 128
    $region33: #{tpu_custom_call.1} parent=1 // pred_fallthru
      _
    %409 = vsyncpa [#allocation3], 1
    %410 = vsyncpa [#allocation4], 1

</llo_original>
